<compile_context>
chip_gen: v7x
topology: tpu7x:2x2x1
jax: 0.10.0
libtpu: 0.0.40
codegen_flags: <defaults>
</compile_context>

<pallas_src>
import functools
import numpy as np

import jax
import jax.numpy as jnp
from jax import lax
from jax.experimental import pallas as pl
from jax.experimental.pallas import tpu as pltpu


# ----------------------------- Pallas kernels ------------------------------

def _patch_embed_kernel(p_ref, w_ref, b_ref, pos_ref, o_ref):
    # o = patches @ W + b + pos_embed   (conv k=s=P expressed as a linear layer)
    o_ref[0] = (jnp.dot(p_ref[0], w_ref[...], preferred_element_type=jnp.float32)
                + b_ref[...] + pos_ref[...])


def patch_embed(patches, w, b, pos):
    """patches: [B, Np, C*P*P], w: [C*P*P, E], b: [1, E], pos: [Np, E] -> [B, Np, E]."""
    B, Np, K = patches.shape
    E = w.shape[1]
    return pl.pallas_call(
        _patch_embed_kernel,
        out_shape=jax.ShapeDtypeStruct((B, Np, E), jnp.float32),
        grid=(B,),
        in_specs=[pl.BlockSpec((1, Np, K), lambda i: (i, 0, 0)),
                  pl.BlockSpec((K, E), lambda i: (0, 0)),
                  pl.BlockSpec((1, E), lambda i: (0, 0)),
                  pl.BlockSpec((Np, E), lambda i: (0, 0))],
        out_specs=pl.BlockSpec((1, Np, E), lambda i: (i, 0, 0)),
        compiler_params=pltpu.CompilerParams(dimension_semantics=("parallel",)),
    )(patches, w, b, pos)


def _ln_linear_kernel(x_ref, g_ref, bta_ref, w_ref, wb_ref, o_ref):
    # o = LayerNorm(x) @ W + b      (biased variance, eps=1e-5, like nn.LayerNorm)
    x = x_ref[0]
    mu = jnp.mean(x, axis=-1, keepdims=True)
    var = jnp.mean((x - mu) ** 2, axis=-1, keepdims=True)
    xn = (x - mu) * lax.rsqrt(var + 1e-5) * g_ref[...] + bta_ref[...]
    o_ref[0] = jnp.dot(xn, w_ref[...], preferred_element_type=jnp.float32) + wb_ref[...]


def ln_linear(x, g, b, w, wb):
    """x: [B, L, D] -> LayerNorm + Linear -> [B, L, N], fused."""
    B, L, D = x.shape
    N = w.shape[1]
    return pl.pallas_call(
        _ln_linear_kernel,
        out_shape=jax.ShapeDtypeStruct((B, L, N), jnp.float32),
        grid=(B,),
        in_specs=[pl.BlockSpec((1, L, D), lambda i: (i, 0, 0)),
                  pl.BlockSpec((1, D), lambda i: (0, 0)),
                  pl.BlockSpec((1, D), lambda i: (0, 0)),
                  pl.BlockSpec((D, N), lambda i: (0, 0)),
                  pl.BlockSpec((1, N), lambda i: (0, 0))],
        out_specs=pl.BlockSpec((1, L, N), lambda i: (i, 0, 0)),
        compiler_params=pltpu.CompilerParams(dimension_semantics=("parallel",)),
    )(x, g, b, w, wb)


def _block_attn_fc1_kernel(x_ref, n1g_ref, n1b_ref, wqkv_ref, bqkv_ref,
                           wproj_ref, bproj_ref, n2g_ref, n2b_ref,
                           wfc1_ref, bfc1_ref,
                           x1_ref, h_ref, *, num_heads, scale):
    """Fused: LN1 -> QKV -> MHA (heads unrolled, proj folded) -> +res -> LN2 -> fc1."""
    x = x_ref[0]                                        # [L, E]
    E = x.shape[-1]
    Dh = E // num_heads

    # LN1 (biased variance, eps=1e-5)
    mu = jnp.mean(x, axis=-1, keepdims=True)
    var = jnp.mean((x - mu) ** 2, axis=-1, keepdims=True)
    xn = (x - mu) * lax.rsqrt(var + 1e-5) * n1g_ref[...] + n1b_ref[...]

    # Fused QKV projection: one MXU pass over the [E, 3E] weight.
    qkv = jnp.dot(xn, wqkv_ref[...], preferred_element_type=jnp.float32) + bqkv_ref[...]

    # Multi-head attention.  Heads are unrolled inside the kernel (no per-head
    # grid steps / HBM round-trips); output projection is folded into the loop:
    #   concat_h(o_h) @ Wproj = sum_h o_h @ Wproj[h*Dh:(h+1)*Dh, :]
    wproj = wproj_ref[...]
    attn_out = x + bproj_ref[...]                       # residual + proj bias
    for hd in range(num_heads):
        q = qkv[:, hd * Dh:(hd + 1) * Dh]
        k = qkv[:, E + hd * Dh: E + (hd + 1) * Dh]
        v = qkv[:, 2 * E + hd * Dh: 2 * E + (hd + 1) * Dh]
        s = jnp.einsum('qd,kd->qk', q, k,
                       preferred_element_type=jnp.float32) * scale          # [L, L]
        s = s - jnp.max(s, axis=-1, keepdims=True)
        p = jnp.exp(s)
        denom = jnp.sum(p, axis=-1, keepdims=True)
        r = pl.reciprocal(denom, approx=True)           # EUP slot
        r = r * (2.0 - denom * r)                       # one Newton step -> ~f32 exact
        o = jnp.dot(p * r, v, preferred_element_type=jnp.float32)           # [L, Dh]
        attn_out = attn_out + jnp.dot(o, wproj[hd * Dh:(hd + 1) * Dh, :],
                                      preferred_element_type=jnp.float32)

    x1 = attn_out                                       # x + Attn(LN1(x))
    x1_ref[0] = x1

    # LN2 + fc1 (GELU applied outside the kernel).
    mu2 = jnp.mean(x1, axis=-1, keepdims=True)
    var2 = jnp.mean((x1 - mu2) ** 2, axis=-1, keepdims=True)
    x1n = (x1 - mu2) * lax.rsqrt(var2 + 1e-5) * n2g_ref[...] + n2b_ref[...]
    h_ref[0] = jnp.dot(x1n, wfc1_ref[...], preferred_element_type=jnp.float32) + bfc1_ref[...]


def block_attn_fc1(x, p, num_heads):
    B, L, E = x.shape
    H = p["fc1_w"].shape[1]
    Dh = E // num_heads
    kern = functools.partial(_block_attn_fc1_kernel,
                             num_heads=num_heads, scale=Dh ** -0.5)
    row3 = lambda i: (i, 0, 0)
    cst2 = lambda i: (0, 0)
    return pl.pallas_call(
        kern,
        out_shape=(jax.ShapeDtypeStruct((B, L, E), jnp.float32),
                   jax.ShapeDtypeStruct((B, L, H), jnp.float32)),
        grid=(B,),
        in_specs=[pl.BlockSpec((1, L, E), row3),
                  pl.BlockSpec((1, E), cst2), pl.BlockSpec((1, E), cst2),
                  pl.BlockSpec((E, 3 * E), cst2), pl.BlockSpec((1, 3 * E), cst2),
                  pl.BlockSpec((E, E), cst2), pl.BlockSpec((1, E), cst2),
                  pl.BlockSpec((1, E), cst2), pl.BlockSpec((1, E), cst2),
                  pl.BlockSpec((E, H), cst2), pl.BlockSpec((1, H), cst2)],
        out_specs=(pl.BlockSpec((1, L, E), row3),
                   pl.BlockSpec((1, L, H), row3)),
        compiler_params=pltpu.CompilerParams(dimension_semantics=("parallel",)),
    )(x, p["n1_g"], p["n1_b"], p["qkv_w"], p["qkv_b"],
      p["proj_w"], p["proj_b"], p["n2_g"], p["n2_b"], p["fc1_w"], p["fc1_b"])


def _block_fc2_kernel(x1_ref, g_ref, wfc2_ref, bfc2_ref, o_ref):
    # o = x1 + gelu_act @ Wfc2 + b      (fc2 + residual fused)
    o_ref[0] = (x1_ref[0]
                + jnp.dot(g_ref[0], wfc2_ref[...], preferred_element_type=jnp.float32)
                + bfc2_ref[...])


def block_fc2(x1, g, p):
    B, L, E = x1.shape
    H = g.shape[-1]
    row3 = lambda i: (i, 0, 0)
    cst2 = lambda i: (0, 0)
    return pl.pallas_call(
        _block_fc2_kernel,
        out_shape=jax.ShapeDtypeStruct((B, L, E), jnp.float32),
        grid=(B,),
        in_specs=[pl.BlockSpec((1, L, E), row3),
                  pl.BlockSpec((1, L, H), row3),
                  pl.BlockSpec((H, E), cst2),
                  pl.BlockSpec((1, E), cst2)],
        out_specs=pl.BlockSpec((1, L, E), row3),
        compiler_params=pltpu.CompilerParams(dimension_semantics=("parallel",)),
    )(x1, g, p["fc2_w"], p["fc2_b"])


def _masked_mse_kernel(p_ref, t_ref, m_ref, o_ref, *, inv_dim):
    # Fused masked MSE: loss = sum_i mask_i * mean_j (p_ij - t_ij)^2 / sum_i mask_i
    d = p_ref[...] - t_ref[...]
    tok = jnp.sum(d * d, axis=-1, keepdims=True) * inv_dim      # [M, 1]
    m = m_ref[...]                                               # [M, 1]
    num = jnp.sum(tok * m, axis=0, keepdims=True)                # [1, 1]
    den = jnp.sum(m, axis=0, keepdims=True)                      # [1, 1]
    o_ref[...] = num / den


def masked_mse_loss(pred, target, mask):
    """pred/target: [B, Np, P*P*C], mask: [B, Np] -> scalar loss."""
    B, Np, Ppc = pred.shape
    M = B * Np
    out = pl.pallas_call(
        functools.partial(_masked_mse_kernel, inv_dim=1.0 / Ppc),
        out_shape=jax.ShapeDtypeStruct((1, 1), jnp.float32),
    )(pred.reshape(M, Ppc), target.reshape(M, Ppc), mask.reshape(M, 1))
    return out[0, 0]


# ------------------------ sincos positional embedding ----------------------

def _get_1d_sincos(embed_dim, pos):
    omega = np.arange(embed_dim // 2, dtype=np.float64)
    omega /= embed_dim / 2.0
    omega = 1.0 / 10000 ** omega
    pos = pos.reshape(-1)
    out = np.einsum("m,d->md", pos, omega)
    return np.concatenate([np.sin(out), np.cos(out)], axis=1)


def get_2d_sincos_pos_embed(embed_dim, grid_size, cls_token=False):
    grid_h = np.arange(grid_size, dtype=np.float32)
    grid_w = np.arange(grid_size, dtype=np.float32)
    grid = np.meshgrid(grid_w, grid_h)
    grid = np.stack(grid, axis=0).reshape([2, 1, grid_size, grid_size])
    emb_h = _get_1d_sincos(embed_dim // 2, grid[0])
    emb_w = _get_1d_sincos(embed_dim // 2, grid[1])
    pos = np.concatenate([emb_h, emb_w], axis=1)
    if cls_token:
        pos = np.concatenate([np.zeros([1, embed_dim]), pos], axis=0)
    return pos.astype(np.float32)


# ------------------------------ parameters ---------------------------------

def xavier_uniform(key, in_dim, out_dim):
    # Weights are stored pre-transposed in [K, N] layout (no .T at call time).
    a = float(np.sqrt(6.0 / (in_dim + out_dim)))
    return jax.random.uniform(key, (in_dim, out_dim), jnp.float32, -a, a)


def init_block_params(key, dim, mlp_ratio):
    hidden = int(dim * mlp_ratio)
    ks = jax.random.split(key, 4)
    return dict(
        n1_g=jnp.ones((1, dim), jnp.float32), n1_b=jnp.zeros((1, dim), jnp.float32),
        qkv_w=xavier_uniform(ks[0], dim, 3 * dim), qkv_b=jnp.zeros((1, 3 * dim), jnp.float32),
        proj_w=xavier_uniform(ks[1], dim, dim), proj_b=jnp.zeros((1, dim), jnp.float32),
        n2_g=jnp.ones((1, dim), jnp.float32), n2_b=jnp.zeros((1, dim), jnp.float32),
        fc1_w=xavier_uniform(ks[2], dim, hidden), fc1_b=jnp.zeros((1, hidden), jnp.float32),
        fc2_w=xavier_uniform(ks[3], hidden, dim), fc2_b=jnp.zeros((1, dim), jnp.float32),
    )


def init_params(key, cfg):
    C, P, E, Ed = cfg["in_channels"], cfg["patch_size"], cfg["embed_dim"], cfg["dec_embed_dim"]
    Np = (cfg["img_size"] // P) ** 2
    gs = int(Np ** 0.5)
    keys = jax.random.split(key, 5 + cfg["depth"] + cfg["dec_depth"])
    it = iter(keys)
    params = {}
    # conv weight xavier-init'd on its [E, C*P*P] view (as in torch), stored as [C*P*P, E]
    params["patch_w"] = xavier_uniform(next(it), C * P * P, E)
    params["patch_b"] = jnp.zeros((1, E), jnp.float32)
    params["cls_token"] = 0.02 * jax.random.normal(next(it), (1, 1, E), jnp.float32)
    params["mask_token"] = 0.02 * jax.random.normal(next(it), (1, 1, Ed), jnp.float32)
    params["pos_embed"] = jnp.asarray(get_2d_sincos_pos_embed(E, gs, cls_token=True))[None]
    params["dec_pos_embed"] = jnp.asarray(get_2d_sincos_pos_embed(Ed, gs, cls_token=True))[None]
    params["blocks"] = [init_block_params(next(it), E, cfg["mlp_ratio"])
                        for _ in range(cfg["depth"])]
    params["norm_g"] = jnp.ones((1, E), jnp.float32)
    params["norm_b"] = jnp.zeros((1, E), jnp.float32)
    params["dec_embed_w"] = xavier_uniform(next(it), E, Ed)
    params["dec_embed_b"] = jnp.zeros((1, Ed), jnp.float32)
    params["dec_blocks"] = [init_block_params(next(it), Ed, cfg["mlp_ratio"])
                            for _ in range(cfg["dec_depth"])]
    params["dec_norm_g"] = jnp.ones((1, Ed), jnp.float32)
    params["dec_norm_b"] = jnp.zeros((1, Ed), jnp.float32)
    params["dec_pred_w"] = xavier_uniform(next(it), Ed, P * P * C)
    params["dec_pred_b"] = jnp.zeros((1, P * P * C), jnp.float32)
    return params


# ------------------------------- model --------------------------------------

def transformer_block(x, p, num_heads):
    """timm-style pre-norm block: x + Attn(LN(x)); x + MLP(LN(x)).  Two fused kernels."""
    x1, h = block_attn_fc1(x, p, num_heads)
    # TODO(synk): exact erf-GELU kept as XLA glue (erf lowering inside Mosaic not
    # relied upon); fold into the fc2 kernel once verified on the target toolchain.
    g = jax.nn.gelu(h, approximate=False)
    return block_fc2(x1, g, p)


def mae_forward(params, imgs, mask_key, mask_ratio, cfg):
    B, C, H, W = imgs.shape
    P, E, Ed = cfg["patch_size"], cfg["embed_dim"], cfg["dec_embed_dim"]
    h = w = H // P
    Np = h * w

    # ---- patch embed (conv k=s=P as linear over (c, ph, pw) patches) + pos embed, fused
    patches = imgs.reshape(B, C, h, P, w, P).transpose(0, 2, 4, 1, 3, 5)
    patches = patches.reshape(B, Np, C * P * P)
    x = patch_embed(patches, params["patch_w"], params["patch_b"],
                    params["pos_embed"][0, 1:, :])                  # [B, Np, E]

    # ---- random masking (torch.rand / argsort / gather semantics; XLA glue)
    Lk = int(Np * (1 - mask_ratio))
    noise = jax.random.uniform(mask_key, (B, Np), jnp.float32)
    id_shuffle = jnp.argsort(noise, axis=1)
    id_unshuffle = jnp.argsort(id_shuffle, axis=1)
    id_keep = id_shuffle[:, :Lk]
    x_mask = jnp.take_along_axis(x, id_keep[:, :, None], axis=1)
    mask = jnp.ones((B, Np), jnp.float32).at[:, :Lk].set(0.0)
    mask = jnp.take_along_axis(mask, id_unshuffle, axis=1)

    # ---- cls token + encoder blocks
    cls = params["cls_token"] + params["pos_embed"][:, :1, :]
    cls = jnp.broadcast_to(cls, (B, 1, E))
    x = jnp.concatenate([cls, x_mask], axis=1)
    for bp in params["blocks"]:
        x = transformer_block(x, bp, cfg["num_heads"])

    # ---- encoder final norm + decoder_embed, fused into one kernel
    x = ln_linear(x, params["norm_g"], params["norm_b"],
                  params["dec_embed_w"], params["dec_embed_b"])     # [B, L1, Ed]
    L1 = x.shape[1]

    # ---- decoder token unshuffle (XLA glue) + decoder blocks
    n_mask = Np + 1 - L1
    mask_tokens = jnp.broadcast_to(params["mask_token"], (B, n_mask, Ed))
    x_ = jnp.concatenate([x[:, 1:, :], mask_tokens], axis=1)
    x_ = jnp.take_along_axis(x_, id_unshuffle[:, :, None], axis=1)
    x = jnp.concatenate([x[:, :1, :], x_], axis=1)
    x = x + params["dec_pos_embed"]
    for bp in params["dec_blocks"]:
        x = transformer_block(x, bp, cfg["dec_num_heads"])

    # ---- decoder norm + decoder_pred, fused into one kernel
    pred = ln_linear(x, params["dec_norm_g"], params["dec_norm_b"],
                     params["dec_pred_w"], params["dec_pred_b"])    # [B, L2, P*P*C]
    pred = pred[:, 1:, :]

    # ---- loss (norm_pix_loss = False, module default); fused masked-MSE scalar kernel
    target = imgs.reshape(B, C, h, P, w, P).transpose(0, 2, 4, 3, 5, 1)  # bchpwq->bhwpqc
    target = target.reshape(B, Np, P * P * C)
    loss = masked_mse_loss(pred, target, mask)
    return loss, pred, mask


# -------------------------------- main ---------------------------------------

if __name__ == "__main__":
    # Small, forward-consistent config (ViT-style MAE, scaled down)
    cfg = dict(img_size=16, patch_size=4, in_channels=3,
               embed_dim=32, depth=2, num_heads=4,
               dec_embed_dim=32, dec_depth=2, dec_num_heads=4,
               mlp_ratio=4.0)

    root = jax.random.PRNGKey(0)
    pkey, ikey, mkey = jax.random.split(root, 3)

    params = init_params(pkey, cfg)
    imgs = jax.random.normal(ikey, (2, cfg["in_channels"],
                                    cfg["img_size"], cfg["img_size"]), jnp.float32)

    loss, pred, mask = mae_forward(params, imgs, mkey, 0.75, cfg)
    jax.block_until_ready((loss, pred, mask))

    assert pred.shape == (2, 16, cfg["patch_size"] ** 2 * cfg["in_channels"])
    assert mask.shape == (2, 16)
    assert loss.shape == ()
    assert bool(jnp.isfinite(loss))
    print("KERNEL_OK")
</pallas_src>

<mosaic_0001>
module attributes {stable_mosaic.version = 11 : i64} {
  func.func @_patch_embed_kernel(%arg0: i32, %arg1: memref<1x16x48xf32, #tpu.memory_space<vmem>>, %arg2: memref<48x32xf32, #tpu.memory_space<vmem>>, %arg3: memref<1x32xf32, #tpu.memory_space<vmem>>, %arg4: memref<16x32xf32, #tpu.memory_space<vmem>>, %arg5: memref<1x16x32xf32, #tpu.memory_space<vmem>>) attributes {dimension_semantics = [#tpu.dimension_semantics<parallel>], iteration_bounds = array<i64: 2>, scalar_prefetch = 0 : i64, scratch_operands = 0 : i64, tpu.core_type = #tpu.core_type<tc>, window_params = [{transform_indices = @transform_0, window_bounds = array<i64: 1, 16, 48>}, {pipeline_mode = #tpu.pipeline_mode<synchronous>, transform_indices = @transform_1, window_bounds = array<i64: 48, 32>}, {pipeline_mode = #tpu.pipeline_mode<synchronous>, transform_indices = @transform_2, window_bounds = array<i64: 1, 32>}, {pipeline_mode = #tpu.pipeline_mode<synchronous>, transform_indices = @transform_3, window_bounds = array<i64: 16, 32>}, {transform_indices = @transform_4, window_bounds = array<i64: 1, 16, 32>}]} {
    %c0 = arith.constant 0 : index
    %c0_0 = arith.constant 0 : index
    %c0_1 = arith.constant 0 : index
    %0 = vector.load %arg1[%c0, %c0_0, %c0_1] : memref<1x16x48xf32, #tpu.memory_space<vmem>>, vector<1x16x48xf32>
    %1 = vector.shape_cast %0 : vector<1x16x48xf32> to vector<16x48xf32>
    %c0_2 = arith.constant 0 : index
    %c0_3 = arith.constant 0 : index
    %2 = vector.load %arg2[%c0_2, %c0_3] : memref<48x32xf32, #tpu.memory_space<vmem>>, vector<48x32xf32>
    %cst = arith.constant dense<0.000000e+00> : vector<16x32xf32>
    %3 = tpu.matmul %1, %2, %cst {dimension_numbers = #tpu.dot_dimension_numbers<[1], [0], [0], [1], [0, 0, 1, 1], [], []>} : vector<16x48xf32>, vector<48x32xf32>, vector<16x32xf32> -> vector<16x32xf32>
    %c0_4 = arith.constant 0 : index
    %c0_5 = arith.constant 0 : index
    %4 = vector.load %arg3[%c0_4, %c0_5] : memref<1x32xf32, #tpu.memory_space<vmem>>, vector<1x32xf32>
    %5 = vector.broadcast %4 : vector<1x32xf32> to vector<16x32xf32>
    %6 = arith.addf %3, %5 : vector<16x32xf32>
    %c0_6 = arith.constant 0 : index
    %c0_7 = arith.constant 0 : index
    %7 = vector.load %arg4[%c0_6, %c0_7] : memref<16x32xf32, #tpu.memory_space<vmem>>, vector<16x32xf32>
    %8 = arith.addf %6, %7 : vector<16x32xf32>
    %c0_8 = arith.constant 0 : index
    %c0_9 = arith.constant 0 : index
    %c0_10 = arith.constant 0 : index
    %9 = vector.load %arg5[%c0_8, %c0_9, %c0_10] : memref<1x16x32xf32, #tpu.memory_space<vmem>>, vector<1x16x32xf32>
    %10 = vector.shape_cast %9 : vector<1x16x32xf32> to vector<16x32xf32>
    %11 = vector.shape_cast %8 : vector<16x32xf32> to vector<1x16x32xf32>
    tpu.vector_store %arg5[%c0_8, %c0_9, %c0_10], %11 {strides = array<i32>} : memref<1x16x32xf32, #tpu.memory_space<vmem>>, vector<1x16x32xf32>,
    return
  }
  func.func @transform_0(%arg0: i32) -> (i32, i32, i32) {
    %c0_i32 = arith.constant 0 : i32
    %c0_i32_0 = arith.constant 0 : i32
    %c0_i32_1 = arith.constant 0 : i32
    return %arg0, %c0_i32, %c0_i32_0 : i32, i32, i32
  }
  func.func @transform_1(%arg0: i32) -> (i32, i32) {
    %c0_i32 = arith.constant 0 : i32
    %c0_i32_0 = arith.constant 0 : i32
    %c0_i32_1 = arith.constant 0 : i32
    return %c0_i32, %c0_i32_0 : i32, i32
  }
  func.func @transform_2(%arg0: i32) -> (i32, i32) {
    %c0_i32 = arith.constant 0 : i32
    %c0_i32_0 = arith.constant 0 : i32
    %c0_i32_1 = arith.constant 0 : i32
    return %c0_i32, %c0_i32_0 : i32, i32
  }
  func.func @transform_3(%arg0: i32) -> (i32, i32) {
    %c0_i32 = arith.constant 0 : i32
    %c0_i32_0 = arith.constant 0 : i32
    %c0_i32_1 = arith.constant 0 : i32
    return %c0_i32, %c0_i32_0 : i32, i32
  }
  func.func @transform_4(%arg0: i32) -> (i32, i32, i32) {
    %c0_i32 = arith.constant 0 : i32
    %c0_i32_0 = arith.constant 0 : i32
    %c0_i32_1 = arith.constant 0 : i32
    return %arg0, %c0_i32, %c0_i32_0 : i32, i32, i32
  }
}

</mosaic_0001>

<llo_original>
// kernel: tpu_custom_call.1
$region0: #{tpu_custom_call.1}
  #allocation0 [shape = 'u32[]', space=smem, size = 0x4, offset = 0x4, fixed_abs, tag = 'smem constant byte address 0x4 - core index']
  #allocation1 [shape = 'u32[144,128]{1,0:T(1,128)}', space=vmem, size = 0x12000, scoped, tag = 'internal scratch']
  %s0 = inlined_call_operand.vmem [shape: f32[2,16,48], index: 0, kind: input, shape index: {}]
  %s1 = inlined_call_operand.vmem [shape: f32[48,32], index: 1, kind: input, shape index: {}]
  %s2 = inlined_call_operand.vmem [shape: f32[1,32], index: 2, kind: input, shape index: {}]
  %s3 = inlined_call_operand.vmem [shape: f32[16,32], index: 3, kind: input, shape index: {}]
  %s4 = inlined_call_operand.hbm [shape: f32[2,16,32], index: 4, kind: output, shape index: {}]
  %s5 = sld [smem:[#allocation0]]
  $region49: #{tpu_custom_call.1} parent=0
    _
  %s7 = ssub.s32 1, %s5
  %s8 = scalar_select 0, %s7, %s5
  $region1: #{tpu_custom_call.1} parent=0
    #allocation2 [shape = 'u8[16384]{0}', space=vmem, size = 0x4000, scoped, tag = 'output window, operand 0']
    #allocation3 [shape = 's32[2]{0}', space=sflag, size = 0x8, scoped, tag = 'scoped memory for tpu_custom_call.1']
    %9 = vsyncpa [#allocation3], 0
    %s10 = scalar_lea.sflag [#allocation3], 1
    %11 = vsyncpa %s10, 0
    loop: start=0, step=1, limit=4
    $region2: #{tpu_custom_call.1} parent=1 // loop_pre_header
      _
    $region3: #{tpu_custom_call.1} parent=1 // loop_header
      %s13 = sphi 0, %s17
      %p14 = scmp.ge.s32.totalorder %s13, 4
      %s23 = sphi 0, %s25
      %s26 = sphi 0, %s23
      %s27 = sphi 0, %s26
      %s43 = sphi 0, %s27
      %s47 = sphi 0, %s47
      %s49 = sphi 0, %s47
      %s50 = sphi 0, %s49
      %s64 = sphi 0, %s50
      %s68 = sphi 0, %s68
      %s70 = sphi 0, %s68
      %s71 = sphi 0, %s70
      %s85 = sphi 0, %s71
      %s89 = sphi 0, %s89
      %s91 = sphi 0, %s89
      %s92 = sphi 0, %s91
      %s106 = sphi 0, %s92
      %s112 = sphi 0, %s114
      %s115 = sphi 0, %s112
      %s116 = sphi 0, %s115
      %s132 = sphi 0, %s116
    $region4: #{tpu_custom_call.1} parent=1 // loop_header_branch
      %16 = sbr.rel (%p14) target = $region8
    $region5: #{tpu_custom_call.1} parent=1 // loop_body
      %s18 = ssub.s32 %s13, 1
      %s19 = ssub.s32 %s13, 2
      %s20 = sadd.s32 %s13, 1
      %s21 = ssub.s32 %s13, %s20
      %p22 = scmp.eq.s32.totalorder %s21, 0
      %s24 = sadd.s32 %s23, 1
      %s25 = scalar_select %p22, %s23, %s24
      %p28 = pneg %p22
      %p29 = scmp.eq.s32.totalorder %s13, 1
      %p30 = por %p28, %p29
      %p31 = scmp.ne.s32.totalorder %s23, %s26
      %p32 = scmp.eq.s32.totalorder %s13, 0
      %p33 = por %p31, %p32
      %p34 = scmp.ne.s32.totalorder %s23, %s26
      %p35 = scmp.eq.s32.totalorder %s18, 1
      %p36 = por %p34, %p35
      %p37 = scmp.ne.s32.totalorder %s26, %s27
      %p38 = scmp.eq.s32.totalorder %s18, 0
      %p39 = por %p37, %p38
      %p40 = scmp.ne.s32.totalorder %s26, %s27
      %p41 = scmp.eq.s32.totalorder %s19, 1
      %p42 = por %p40, %p41
      %p44 = scmp.ne.s32.totalorder %s27, %s43
      %p45 = scmp.eq.s32.totalorder %s19, 0
      %p46 = por %p44, %p45
      %s48 = sadd.s32 %s47, 1
      %p51 = scmp.eq.s32.totalorder %s13, 1
      %p52 = scmp.ne.s32.totalorder %s47, %s49
      %p53 = scmp.eq.s32.totalorder %s13, 0
      %p54 = por %p52, %p53
      %p55 = scmp.ne.s32.totalorder %s47, %s49
      %p56 = scmp.eq.s32.totalorder %s18, 1
      %p57 = por %p55, %p56
      %p58 = scmp.ne.s32.totalorder %s49, %s50
      %p59 = scmp.eq.s32.totalorder %s18, 0
      %p60 = por %p58, %p59
      %p61 = scmp.ne.s32.totalorder %s49, %s50
      %p62 = scmp.eq.s32.totalorder %s19, 1
      %p63 = por %p61, %p62
      %p65 = scmp.ne.s32.totalorder %s50, %s64
      %p66 = scmp.eq.s32.totalorder %s19, 0
      %p67 = por %p65, %p66
      %s69 = sadd.s32 %s68, 1
      %p72 = scmp.eq.s32.totalorder %s13, 1
      %p73 = scmp.ne.s32.totalorder %s68, %s70
      %p74 = scmp.eq.s32.totalorder %s13, 0
      %p75 = por %p73, %p74
      %p76 = scmp.ne.s32.totalorder %s68, %s70
      %p77 = scmp.eq.s32.totalorder %s18, 1
      %p78 = por %p76, %p77
      %p79 = scmp.ne.s32.totalorder %s70, %s71
      %p80 = scmp.eq.s32.totalorder %s18, 0
      %p81 = por %p79, %p80
      %p82 = scmp.ne.s32.totalorder %s70, %s71
      %p83 = scmp.eq.s32.totalorder %s19, 1
      %p84 = por %p82, %p83
      %p86 = scmp.ne.s32.totalorder %s71, %s85
      %p87 = scmp.eq.s32.totalorder %s19, 0
      %p88 = por %p86, %p87
      %s90 = sadd.s32 %s89, 1
      %p93 = scmp.eq.s32.totalorder %s13, 1
      %p94 = scmp.ne.s32.totalorder %s89, %s91
      %p95 = scmp.eq.s32.totalorder %s13, 0
      %p96 = por %p94, %p95
      %p97 = scmp.ne.s32.totalorder %s89, %s91
      %p98 = scmp.eq.s32.totalorder %s18, 1
      %p99 = por %p97, %p98
      %p100 = scmp.ne.s32.totalorder %s91, %s92
      %p101 = scmp.eq.s32.totalorder %s18, 0
      %p102 = por %p100, %p101
      %p103 = scmp.ne.s32.totalorder %s91, %s92
      %p104 = scmp.eq.s32.totalorder %s19, 1
      %p105 = por %p103, %p104
      %p107 = scmp.ne.s32.totalorder %s92, %s106
      %p108 = scmp.eq.s32.totalorder %s19, 0
      %p109 = por %p107, %p108
      %s110 = ssub.s32 %s13, %s20
      %p111 = scmp.eq.s32.totalorder %s110, 0
      %s113 = sadd.s32 %s112, 1
      %s114 = scalar_select %p111, %s112, %s113
      %p117 = pneg %p111
      %p118 = scmp.eq.s32.totalorder %s13, 1
      %p119 = por %p117, %p118
      %p120 = scmp.ne.s32.totalorder %s112, %s115
      %p121 = scmp.eq.s32.totalorder %s13, 0
      %p122 = por %p120, %p121
      %p123 = scmp.ne.s32.totalorder %s112, %s115
      %p124 = scmp.eq.s32.totalorder %s18, 1
      %p125 = por %p123, %p124
      %p126 = scmp.ne.s32.totalorder %s115, %s116
      %p127 = scmp.eq.s32.totalorder %s18, 0
      %p128 = por %p126, %p127
      %p129 = scmp.ne.s32.totalorder %s115, %s116
      %p130 = scmp.eq.s32.totalorder %s19, 1
      %p131 = por %p129, %p130
      %p133 = scmp.ne.s32.totalorder %s116, %s132
      %p134 = scmp.eq.s32.totalorder %s19, 0
      %p135 = por %p133, %p134
      %p136 = scmp.le.s32.totalorder 1, %s13
      %p137 = scmp.lt.s32.totalorder %s13, 3
      %p138 = pnand %p136, %p137
      %p139 = pneg %p138
      // Predicated region
      $region9: #{tpu_custom_call.1} parent=5 // pred_check
        _
      $region10: #{tpu_custom_call.1} parent=5 // pred_check_branch
        %141 = sbr.rel (%p138) target = $region12
      $region11: #{tpu_custom_call.1} parent=5 // pred_region
        %s142 = ssub.s32 %s13, 1
        // Predicated region
        $region13: #{tpu_custom_call.1} parent=11 // pred_check
          %p143 = pneg %p60
        $region14: #{tpu_custom_call.1} parent=11 // pred_check_branch
          %145 = sbr.rel (%p143) target = $region16
        $region15: #{tpu_custom_call.1} parent=11 // pred_region
          _
        $region16: #{tpu_custom_call.1} parent=11 // pred_fallthru
          _
        // Predicated region
        $region17: #{tpu_custom_call.1} parent=11 // pred_check
          %p146 = pneg %p81
        $region18: #{tpu_custom_call.1} parent=11 // pred_check_branch
          %148 = sbr.rel (%p146) target = $region20
        $region19: #{tpu_custom_call.1} parent=11 // pred_region
          _
        $region20: #{tpu_custom_call.1} parent=11 // pred_fallthru
          _
        // Predicated region
        $region21: #{tpu_custom_call.1} parent=11 // pred_check
          %p149 = pneg %p102
        $region22: #{tpu_custom_call.1} parent=11 // pred_check_branch
          %151 = sbr.rel (%p149) target = $region24
        $region23: #{tpu_custom_call.1} parent=11 // pred_region
          _
        $region24: #{tpu_custom_call.1} parent=11 // pred_fallthru
          _
      $region12: #{tpu_custom_call.1} parent=5 // pred_fallthru
        _
      %p152 = scmp.lt.s32.totalorder %s13, 2
      // Predicated region
      $region25: #{tpu_custom_call.1} parent=5 // pred_check
        %p153 = pneg %p152
      $region26: #{tpu_custom_call.1} parent=5 // pred_check_branch
        %155 = sbr.rel (%p153) target = $region28
      $region27: #{tpu_custom_call.1} parent=5 // pred_region
        // Predicated region
        $region29: #{tpu_custom_call.1} parent=27 // pred_check
          %p156 = pneg %p33
        $region30: #{tpu_custom_call.1} parent=27 // pred_check_branch
          %158 = sbr.rel (%p156) target = $region32
        $region31: #{tpu_custom_call.1} parent=27 // pred_region
          %p159 = scmp.lt.s32.totalorder %s13, 1
          %s160 = scalar_select %p159, %s13, 1
          %s161 = smul.addr %s160, 2
          %s162 = smul.addr %s161, 8
          %s163 = scalar_lea.vmem %s0, %s162
        $region32: #{tpu_custom_call.1} parent=27 // pred_fallthru
          _
      $region28: #{tpu_custom_call.1} parent=5 // pred_fallthru
        _
      %p164 = scmp.le.s32.totalorder 1, %s13
      %p165 = scmp.lt.s32.totalorder %s13, 3
      %p166 = pnand %p164, %p165
      %p167 = pneg %p166
      // Predicated region
      $region33: #{tpu_custom_call.1} parent=5 // pred_check
        _
      $region34: #{tpu_custom_call.1} parent=5 // pred_check_branch
        %169 = sbr.rel (%p166) target = $region36
      $region35: #{tpu_custom_call.1} parent=5 // pred_region
        %s170 = ssub.s32 %s13, 1
        %p171 = scmp.lt.s32.totalorder %s18, 1
        %s172 = scalar_select %p171, %s18, 1
        %s173 = smul.addr %s172, 2
        %s174 = smul.addr %s173, 8
        %s175 = scalar_lea.vmem %s0, %s174
        %p176 = pneg %p39
        %p177 = pneg %p36
        %p178 = pneg %p60
        %p179 = pneg %p57
        %p180 = pneg %p81
        %p181 = pneg %p78
        %p182 = pneg %p102
        %p183 = pneg %p99
        %p184 = pneg %p128
        %p185 = pneg %p125
        %s186 = sand.u32 %s115, 1
        %s187 = scalar_lea.sflag [#allocation3], %s186
        %s188 = sand.u32 %s115, 1
        %s189 = smul.addr %s188, 16
        %s190 = scalar_lea.vmem [#allocation2], %s189
        %p191 = scmp.lt.s32.totalorder %s18, 1
        %s192 = scalar_select %p191, %s18, 1
        %s193 = smul.addr %s192, 2
        %s194 = smul.addr %s193, 8
        %s195 = scalar_lea.vmem %s0, %s194
        %v196 = vld [vmem:[%s195] sm:$0xff]
        %v197 = vld [vmem:[%s195 + $0x8] sm:$0xff]
        %v198 = vld [vmem:[%s1] sm:$0xff]
        %v199 = vld [vmem:[%s1 + $0x8] sm:$0xff]
        %v200 = vld [vmem:[%s1 + $0x10] sm:$0xff]
        %v201 = vld [vmem:[%s1 + $0x18] sm:$0xff]
        %v202 = vld [vmem:[%s1 + $0x20] sm:$0xff]
        %v203 = vld [vmem:[%s1 + $0x28] sm:$0xff]
        %v204 = vld [vmem:[%s2] sm:$0x1]
        %v206 = vlaneseq
        %v207 = vshrl.u32 %v206, 7
        %v208 = vsub.s32 0, %v207
        %v209 = vrot.slane %v204, %v208
        %vm211 = vcmask 392192
        %v213 = vsel %vm211, %v196, 0
        %v216 = vsel %vm211, %v197, 0
        %218 = vmatprep.subr.mxu0 0.0
        %219 = vmatpush1.msra.mxu0 %v198
        %220 = vmatprep.subr.mxu0 0.0
        %221 = vmatpush1.msra.mxu0 %v199
        %222 = vmatprep.subr.mxu0 0.0
        %223 = vmatpush1.msra.mxu0 %v200
        %224 = vmatprep.subr.mxu0 0.0
        %225 = vmatpush1.msra.mxu0 %v201
        %226 = vmatprep.subr.mxu0 0.0
        %227 = vmatpush1.msra.mxu0 %v202
        %228 = vmatprep.subr.mxu0 0.0
        %229 = vmatpush1.msra.mxu0 %v203
        %230 = vmatprep.subr.mxu0 0.0
        %231 = vmatpush1.msra.mxu0 0.0
        %232 = vmatprep.subr.mxu0 0.0
        %233 = vmatpush1.msra.mxu0 0.0
        %234 = vmatprep.subr.mxu0 0.0
        %235 = vmatpush1.msra.mxu0 0.0
        %236 = vmatprep.subr.mxu0 0.0
        %237 = vmatpush1.msra.mxu0 0.0
        %238 = vmatprep.subr.mxu0 0.0
        %239 = vmatpush1.msra.mxu0 0.0
        %240 = vmatprep.subr.mxu0 0.0
        %241 = vmatpush1.msra.mxu0 0.0
        %242 = vmatprep.subr.mxu0 0.0
        %243 = vmatpush1.msra.mxu0 0.0
        %244 = vmatprep.subr.mxu0 0.0
        %245 = vmatpush1.msra.mxu0 0.0
        %246 = vmatprep.subr.mxu0 0.0
        %247 = vmatpush1.msra.mxu0 0.0
        %248 = vmatprep.subr.mxu0 0.0
        %249 = vmatpush1.msra.mxu0 0.0
        %250 = vmatprep.subr.mxu0 0.0
        %251 = vmatpush1.msra.mxu0 0.0
        %252 = vmatprep.subr.mxu0 0.0
        %253 = vmatpush1.msra.mxu0 0.0
        %254 = vmatprep.subr.mxu0 0.0
        %255 = vmatpush1.msra.mxu0 0.0
        %256 = vmatprep.subr.mxu0 0.0
        %257 = vmatpush1.msra.mxu0 0.0
        %258 = vmatprep.subr.mxu0 0.0
        %259 = vmatpush1.msra.mxu0 0.0
        %260 = vmatprep.subr.mxu0 0.0
        %261 = vmatpush1.msra.mxu0 0.0
        %262 = vmatprep.subr.mxu0 0.0
        %263 = vmatpush1.msra.mxu0 0.0
        %264 = vmatprep.subr.mxu0 0.0
        %265 = vmatpush1.msra.mxu0 0.0
        %266 = vmatprep.subr.mxu0 0.0
        %267 = vmatpush1.msra.mxu0 0.0
        %268 = vmatprep.subr.mxu0 0.0
        %269 = vmatpush1.msra.mxu0 0.0
        %270 = vmatprep.subr.mxu0 0.0
        %271 = vmatpush1.msra.mxu0 0.0
        %272 = vmatprep.subr.mxu0 0.0
        %273 = vmatpush1.msra.mxu0 0.0
        %274 = vmatprep.subr.mxu0 0.0
        %275 = vmatpush1.msra.mxu0 0.0
        %276 = vmatprep.subr.mxu0 0.0
        %277 = vmatpush1.msra.mxu0 0.0
        %278 = vmatprep.subr.mxu0 0.0
        %279 = vmatpush1.msra.mxu0 0.0
        %280 = vmatprep.subr.mxu0 0.0
        %281 = vmatpush1.msra.mxu0 0.0
        %282 = vmatprep.mubr.f32.mxu0 0.0
        %283 = vmatmul.mubr.f32.gmra.mrb[0].mxu0 %v213
        %v284 = vpop.f32.mrb[0].mxu0
        %v285 = vadd.f32 %v209, %v284
        %v286 = vpop.f32.mrb[0].mxu0
        %287 = vmatprep.mubr.f32.mxu0 0.0
        %288 = vmatmul.mubr.f32.gmra.mrb[0].mxu0 %v216
        %v289 = vpop.f32.mrb[0].mxu0
        %v290 = vadd.f32 %v209, %v289
        %v291 = vpop.f32.mrb[0].mxu0
        %292 = vdwg.mxu0
        %v293 = vld [vmem:[%s3] sm:$0xff]
        %v294 = vld [vmem:[%s3 + $0x8] sm:$0xff]
        %v295 = vadd.f32 %v285, %v293
        %v296 = vadd.f32 %v290, %v294
        %vm297 = vcmask 261120
        %298 = vst.msk [vmem:[%s190] sm:$0xff] %vm297, %v295
        %299 = vst.msk [vmem:[%s190 + $0x8] sm:$0xff] %vm297, %v296
        %s300 = sand.u32 %s115, 1
        %s301 = scalar_lea.sflag [#allocation3], %s300
        %s302 = sand.u32 %s115, 1
        %s303 = smul.addr %s302, 16
        %s304 = scalar_lea.vmem [#allocation2], %s303
        // Predicated region
        $region37: #{tpu_custom_call.1} parent=35 // pred_check
          %p305 = pneg %p125
        $region38: #{tpu_custom_call.1} parent=35 // pred_check_branch
          %307 = sbr.rel (%p305) target = $region40
        $region39: #{tpu_custom_call.1} parent=35 // pred_region
          %s309 = ssub.s32 256, 256
          %310 = vsyncadd %s301, %s309
          %s311 = smul.addr %s18, 2
          %s312 = smul.addr %s311, 128
          %s313 = scalar_lea.hbm %s4, %s312
          %s314 = sshll.u32 %s304, 4
          %s315 = int_to_ptr.vmem [resolvable:$true] %s314
          %320 = dma.vmem_to_hbm [thread:$0]  %s315, 256, %s313, %s301, 128, 128, 8
        $region40: #{tpu_custom_call.1} parent=35 // pred_fallthru
          _
      $region36: #{tpu_custom_call.1} parent=5 // pred_fallthru
        _
      %p321 = scmp.le.s32.totalorder 2, %s13
      // Predicated region
      $region41: #{tpu_custom_call.1} parent=5 // pred_check
        %p322 = pneg %p321
      $region42: #{tpu_custom_call.1} parent=5 // pred_check_branch
        %324 = sbr.rel (%p322) target = $region44
      $region43: #{tpu_custom_call.1} parent=5 // pred_region
        %s325 = ssub.s32 %s13, 2
        // Predicated region
        $region45: #{tpu_custom_call.1} parent=43 // pred_check
          %p326 = pneg %p131
        $region46: #{tpu_custom_call.1} parent=43 // pred_check_branch
          %328 = sbr.rel (%p326) target = $region48
        $region47: #{tpu_custom_call.1} parent=43 // pred_region
          %s329 = sand.u32 %s116, 1
          %s330 = scalar_lea.sflag [#allocation3], %s329
          %s331 = sand.u32 %s116, 1
          %s332 = smul.addr %s331, 16
          %s333 = scalar_lea.vmem [#allocation2], %s332
          %334 = dma.done %s330, 256
        $region48: #{tpu_custom_call.1} parent=43 // pred_fallthru
          _
      $region44: #{tpu_custom_call.1} parent=5 // pred_fallthru
        _
    $region6: #{tpu_custom_call.1} parent=1 // loop_footer
      %s17 = sadd.s32 1, %s13
    $region7: #{tpu_custom_call.1} parent=1 // loop_footer_branch
      %12 = sbr.rel target = $region3
    $region8: #{tpu_custom_call.1} parent=1 // loop_exit
      _
    %335 = vsyncpa [#allocation3], 1
    %s336 = scalar_lea.sflag [#allocation3], 1
    %337 = vsyncpa %s336, 1

</llo_original>
